<compile_context>
chip_gen: v7x
topology: tpu7x:2x2x1
jax: 0.10.0
libtpu: 0.0.40
codegen_flags: <defaults>
</compile_context>

<pallas_src>
import functools
import math

import numpy as np
import jax
import jax.numpy as jnp
from jax import lax
from jax.experimental import pallas as pl
from jax.experimental.pallas import tpu as pltpu


def _query_and_group_kernel(xyz_cf_ref, new_xyz_ref, centers_ref, vals_hi_ref, vals_lo_ref,
                            out_ref, *, radius, nsample, subtract_centers):
    xyz_cf = xyz_cf_ref[0]          # (3, N)  f32 point coords, channels-first (lane-dense planes)
    new_xyz = new_xyz_ref[0]        # (Mt, 3) f32 query centers of this npoint tile
    Mt = new_xyz.shape[0]
    N = xyz_cf.shape[1]
    S = nsample

    # ---- ball query: squared distances accumulated over 3 lane-dense (Mt, N) planes ----
    r = jnp.float32(radius)
    r2 = r * r
    d2 = jnp.zeros((Mt, N), jnp.float32)
    for c in range(3):
        diff = new_xyz[:, c:c + 1] - xyz_cf[c:c + 1, :]       # (Mt,1) - (1,N) -> (Mt,N)
        d2 = d2 + diff * diff
    in_ball = d2 < r2                                         # strict '<' (CUDA semantics)

    # ---- inclusive prefix count along N: log2(N) XLU rolls (Hillis-Steele scan) ----
    lane = lax.broadcasted_iota(jnp.int32, (Mt, N), 1)
    cnt = in_ball.astype(jnp.float32)
    shift = 1
    while shift < N:
        rolled = pltpu.roll(cnt, shift, axis=1)               # circular lane roll (XLU)
        cnt = cnt + jnp.where(lane >= shift, rolled, 0.0)
        shift *= 2
    rank = cnt - 1.0                 # rank among in-ball points (valid where in_ball)
    total = cnt[:, N - 1:N]          # (Mt, 1) number of in-ball points per center

    # ---- empty-ball handling folded into the 2-D (Mt, N) domain (no (Mt,S,N) extra ops) ----
    sel_first = jnp.logical_and(total <= 0.5, lane == 0)      # lane 0 of fully-empty balls
    rank = jnp.where(sel_first, 0.0, rank)
    in_ball = jnp.logical_or(in_ball, sel_first)

    # ---- slot -> target rank (CUDA ball_query: empty slots reuse the first in-ball point) ----
    s_iota = lax.broadcasted_iota(jnp.int32, (Mt, S), 1).astype(jnp.float32)
    target = jnp.where(s_iota < total, s_iota, 0.0)           # (Mt, S)

    # ---- bf16 one-hot slab (Mt*S, N); rows sum to exactly 1 ----
    onehot = jnp.logical_and(rank[:, None, :] == target[:, :, None],
                             in_ball[:, None, :]).astype(jnp.bfloat16)
    onehot2 = onehot.reshape(Mt * S, N)

    # ---- fused xyz+feature gather: 2 bf16 MXU passes, f32 accumulate, (D, Mt*S) lane-dense ----
    dn_t = (((1,), (1,)), ((), ()))                           # contract on N  (A @ B^T)
    gathered = lax.dot_general(vals_hi_ref[0], onehot2, dn_t,
                               preferred_element_type=jnp.float32)
    gathered = gathered + lax.dot_general(vals_lo_ref[0], onehot2, dn_t,
                                          preferred_element_type=jnp.float32)    # (D, Mt*S)

    if subtract_centers:
        # Repeat centers S times along lanes on the MXU via a tiny exact 0/1 selector
        # (avoids any (Mt*S, D) narrow-lane broadcast temp in the inner loop).
        centers_cf = jnp.transpose(centers_ref[0])            # (D, Mt) -- small
        c_hi = centers_cf.astype(jnp.bfloat16)
        c_lo = (centers_cf - c_hi.astype(jnp.float32)).astype(jnp.bfloat16)
        col = lax.broadcasted_iota(jnp.int32, (Mt, Mt * S), 1)
        row = lax.broadcasted_iota(jnp.int32, (Mt, Mt * S), 0)
        sel = jnp.logical_and(col >= row * S, col < (row + 1) * S).astype(jnp.bfloat16)
        dn = (((1,), (0,)), ((), ()))
        centers_rep = lax.dot_general(c_hi, sel, dn, preferred_element_type=jnp.float32)
        centers_rep = centers_rep + lax.dot_general(c_lo, sel, dn,
                                                    preferred_element_type=jnp.float32)
        gathered = gathered - centers_rep                     # feature rows of centers are 0

    out_ref[0] = gathered                                     # channels-first, lane-dense store


def _pick_m_tile(M, S, N, requested=None, slab_budget_bytes=4 << 20, max_lanes=2048):
    """Pick the npoint tile mt: mt % 8 == 0 and (mt*S) % 128 == 0 (Mosaic alignment), the
    (mt, S, N) bf16 one-hot slab within `slab_budget_bytes`, and mt*S capped at `max_lanes`.
    Prefers (mt*S) % 256 == 0 (v6e/v7x MXU result tiles). Never falls back to a full-M tile:
    the wrapper pads npoint up to a multiple of the returned tile instead."""
    def align(lane_mult):
        need = lane_mult // math.gcd(S, lane_mult)   # mt multiple of this => (mt*S) % lane_mult == 0
        return math.lcm(need, 8)                     # plus sublane alignment for (mt, .) blocks

    a128 = align(128)
    if requested is not None:
        t = max(1, int(requested))
        return ((t + a128 - 1) // a128) * a128
    budget_mt = max(0, slab_budget_bytes // (2 * S * N))      # bf16 slab
    budget_mt = min(budget_mt, max(1, max_lanes // S))
    for lane_mult in (256, 128):
        a = align(lane_mult)
        t = (budget_mt // a) * a
        if t >= a:
            m_cap = ((M + a - 1) // a) * a
            return min(t, m_cap)
    return a128       # minimum legal tile (may exceed the byte budget only for extreme S*N)


def query_and_group(xyz, new_xyz, features=None, *, radius, nsample, use_xyz=True,
                    m_tile=None, slab_budget_bytes=4 << 20, vmem_limit_bytes=None,
                    single_buffer_invariants=False):
    """JAX/Pallas equivalent of QueryAndGroup.forward.

    xyz: (B, N, 3), new_xyz: (B, npoint, 3), features: (B, C, N) or None.
    Returns (B, 3 + C, npoint, nsample) (or (B, 3, ...) / (B, C, ...) per flags).
    """
    xyz = jnp.asarray(xyz, jnp.float32)
    new_xyz = jnp.asarray(new_xyz, jnp.float32)
    B, N, _ = xyz.shape
    M = new_xyz.shape[1]
    S = int(nsample)

    mt = _pick_m_tile(M, S, N, m_tile, slab_budget_bytes)
    M_pad = ((M + mt - 1) // mt) * mt                         # pad npoint instead of full-M tiles
    new_xyz_p = new_xyz if M_pad == M else jnp.concatenate(
        [new_xyz, jnp.zeros((B, M_pad - M, 3), jnp.float32)], axis=1)

    xyz_cf = jnp.transpose(xyz, (0, 2, 1))                    # (B, 3, N) channels-first coords

    # Fused channels-first gather-values slab (B, D, N) and centers slab (B, M_pad, D).
    if features is None:
        assert use_xyz, "Cannot have not features and not use xyz as a feature!"
        vals_cf = xyz_cf
        centers = new_xyz_p
        subtract_centers = True
    else:
        feats = jnp.asarray(features, jnp.float32)            # already (B, C, N): no transpose
        C = feats.shape[1]
        if use_xyz:
            vals_cf = jnp.concatenate([xyz_cf, feats], axis=1)                    # (B, 3+C, N)
            centers = jnp.concatenate(
                [new_xyz_p, jnp.zeros((B, M_pad, C), jnp.float32)], axis=-1)      # zero feat cols
            subtract_centers = True
        else:
            vals_cf = feats                                                       # (B, C, N)
            centers = jnp.zeros((B, M_pad, 1), jnp.float32)                       # unused
            subtract_centers = False
    D = vals_cf.shape[1]
    Dc = centers.shape[-1]

    # hi/lo bf16 split of the gather values: exact 0/1 one-hot x (hi + lo) via 2 bf16 MXU
    # passes with f32 accumulation gives ~2^-18 relative gather error (vs 3-pass f32 HIGH).
    vals_hi = vals_cf.astype(jnp.bfloat16)
    vals_lo = (vals_cf - vals_hi.astype(jnp.float32)).astype(jnp.bfloat16)

    grid = (B, M_pad // mt)

    def inv_spec(shape):
        # m-invariant inputs stay VMEM-resident across the mi axis; optionally single-buffer
        # them (v7x: 64 MiB VMEM) since their buffer is never swapped.
        if single_buffer_invariants:
            return pl.BlockSpec(shape, lambda b, mi: (b, 0, 0), pipeline_mode=pl.Buffered(1))
        return pl.BlockSpec(shape, lambda b, mi: (b, 0, 0))

    kernel = functools.partial(_query_and_group_kernel, radius=float(radius), nsample=S,
                               subtract_centers=subtract_centers)
    out = pl.pallas_call(
        kernel,
        out_shape=jax.ShapeDtypeStruct((B, D, M_pad * S), jnp.float32),
        grid=grid,
        in_specs=[
            inv_spec((1, 3, N)),                                   # xyz_cf (m-invariant)
            pl.BlockSpec((1, mt, 3), lambda b, mi: (b, mi, 0)),    # new_xyz tile
            pl.BlockSpec((1, mt, Dc), lambda b, mi: (b, mi, 0)),   # centers tile (zero feat cols)
            inv_spec((1, D, N)),                                   # vals_hi (m-invariant)
            inv_spec((1, D, N)),                                   # vals_lo (m-invariant)
        ],
        out_specs=pl.BlockSpec((1, D, mt * S), lambda b, mi: (b, 0, mi)),
        compiler_params=pltpu.CompilerParams(
            # When B > 1, bias the megacore split to the batch axis so both TensorCores
            # don't stream the same m-invariant (D, N) values slab (v7x).
            dimension_semantics=("parallel", "arbitrary") if B > 1 else ("parallel", "parallel"),
            vmem_limit_bytes=vmem_limit_bytes),
    )(xyz_cf, new_xyz_p, centers, vals_hi, vals_lo)

    # channels-first kernel output -> pure reshape (+ npoint un-padding) to the PyTorch layout.
    out = out.reshape(B, D, M_pad, S)
    if M_pad != M:
        out = out[:, :, :M, :]
    return out


def _reference_query_and_group(xyz, new_xyz, features, radius, nsample):
    """Pure NumPy reference with exact CUDA ball_query / group_points semantics."""
    xyz = np.asarray(xyz, np.float32)
    new_xyz = np.asarray(new_xyz, np.float32)
    features = np.asarray(features, np.float32)
    B, N, _ = xyz.shape
    M = new_xyz.shape[1]
    C = features.shape[1]
    r2 = np.float32(radius * radius)
    idx = np.zeros((B, M, nsample), np.int32)
    for b in range(B):
        for m in range(M):
            cnt = 0
            for k in range(N):
                d = xyz[b, k] - new_xyz[b, m]
                d2 = np.float32(np.sum(d * d))
                if d2 < r2:
                    if cnt == 0:
                        idx[b, m, :] = k
                    idx[b, m, cnt] = k
                    cnt += 1
                    if cnt >= nsample:
                        break
    gx = np.zeros((B, 3, M, nsample), np.float32)
    gf = np.zeros((B, C, M, nsample), np.float32)
    for b in range(B):
        for m in range(M):
            for s in range(nsample):
                k = idx[b, m, s]
                gx[b, :, m, s] = xyz[b, k] - new_xyz[b, m]
                gf[b, :, m, s] = features[b, :, k]
    return np.concatenate([gx, gf], axis=1)


if __name__ == "__main__":
    B, N, M, S, C = 2, 128, 16, 16, 5
    radius = 0.3

    key = jax.random.PRNGKey(0)
    k1, k2 = jax.random.split(key)
    xyz = jax.random.uniform(k1, (B, N, 3), jnp.float32)
    new_xyz = xyz[:, :M, :]                      # centers = subset of points -> non-empty balls
    new_xyz = new_xyz.at[:, M - 1, :].set(10.0)  # one far-away center -> exercises empty-ball path
    features = jax.random.normal(k2, (B, C, N), jnp.float32)

    ref = _reference_query_and_group(np.asarray(xyz), np.asarray(new_xyz),
                                     np.asarray(features), radius, S)

    # features + xyz (the standard QueryAndGroup path); m_tile=8 exercises the npoint tiling.
    out = query_and_group(xyz, new_xyz, features, radius=radius, nsample=S,
                          use_xyz=True, m_tile=8)
    out = jax.block_until_ready(out)
    assert out.shape == (B, 3 + C, M, S), out.shape
    np.testing.assert_allclose(np.asarray(out), ref, rtol=1e-5, atol=1e-5)

    # automatic tile selection path.
    out_auto = query_and_group(xyz, new_xyz, features, radius=radius, nsample=S, use_xyz=True)
    out_auto = jax.block_until_ready(out_auto)
    np.testing.assert_allclose(np.asarray(out_auto), ref, rtol=1e-5, atol=1e-5)

    # npoint not a multiple of the tile -> exercises the padding path (no full-M fallback).
    out_pad = query_and_group(xyz, new_xyz[:, :12, :], features, radius=radius, nsample=S,
                              use_xyz=True, m_tile=8)
    out_pad = jax.block_until_ready(out_pad)
    assert out_pad.shape == (B, 3 + C, 12, S), out_pad.shape
    np.testing.assert_allclose(np.asarray(out_pad), ref[:, :, :12, :], rtol=1e-5, atol=1e-5)

    # features=None path (grouped, centered xyz only).
    out_xyz = query_and_group(xyz, new_xyz, None, radius=radius, nsample=S,
                              use_xyz=True, m_tile=8)
    out_xyz = jax.block_until_ready(out_xyz)
    assert out_xyz.shape == (B, 3, M, S), out_xyz.shape
    np.testing.assert_allclose(np.asarray(out_xyz), ref[:, :3], rtol=1e-5, atol=1e-5)

    print("KERNEL_OK")
</pallas_src>

<mosaic_0001>
module attributes {stable_mosaic.version = 11 : i64} {
  func.func @_query_and_group_kernel(%arg0: i32, %arg1: i32, %arg2: memref<1x3x128xf32, #tpu.memory_space<vmem>>, %arg3: memref<1x8x3xf32, #tpu.memory_space<vmem>>, %arg4: memref<1x8x8xf32, #tpu.memory_space<vmem>>, %arg5: memref<1x8x128xbf16, #tpu.memory_space<vmem>>, %arg6: memref<1x8x128xbf16, #tpu.memory_space<vmem>>, %arg7: memref<1x8x128xf32, #tpu.memory_space<vmem>>) attributes {dimension_semantics = [#tpu.dimension_semantics<parallel>, #tpu.dimension_semantics<arbitrary>], iteration_bounds = array<i64: 2, 2>, scalar_prefetch = 0 : i64, scratch_operands = 0 : i64, tpu.core_type = #tpu.core_type<tc>, window_params = [{transform_indices = @transform_0, window_bounds = array<i64: 1, 3, 128>}, {transform_indices = @transform_1, window_bounds = array<i64: 1, 8, 3>}, {transform_indices = @transform_2, window_bounds = array<i64: 1, 8, 8>}, {transform_indices = @transform_3, window_bounds = array<i64: 1, 8, 128>}, {transform_indices = @transform_4, window_bounds = array<i64: 1, 8, 128>}, {transform_indices = @transform_5, window_bounds = array<i64: 1, 8, 128>}]} {
    %c0 = arith.constant 0 : index
    %c0_0 = arith.constant 0 : index
    %c0_1 = arith.constant 0 : index
    %0 = vector.load %arg2[%c0, %c0_0, %c0_1] : memref<1x3x128xf32, #tpu.memory_space<vmem>>, vector<1x3x128xf32>
    %1 = vector.shape_cast %0 : vector<1x3x128xf32> to vector<3x128xf32>
    %c0_2 = arith.constant 0 : index
    %c0_3 = arith.constant 0 : index
    %c0_4 = arith.constant 0 : index
    %2 = vector.load %arg3[%c0_2, %c0_3, %c0_4] : memref<1x8x3xf32, #tpu.memory_space<vmem>>, vector<1x8x3xf32>
    %3 = vector.shape_cast %2 : vector<1x8x3xf32> to vector<8x3xf32>
    %cst = arith.constant 3.000000e-01 : f32
    %cst_5 = arith.constant 3.000000e-01 : f32
    %4 = arith.mulf %cst, %cst_5 : f32
    %cst_6 = arith.constant 0.000000e+00 : f32
    %5 = vector.broadcast %cst_6 : f32 to vector<8x128xf32>
    %6 = vector.extract_strided_slice %3 {offsets = [0, 0], sizes = [8, 1], strides = [1, 1]} : vector<8x3xf32> to vector<8x1xf32>
    %7 = vector.extract_strided_slice %1 {offsets = [0, 0], sizes = [1, 128], strides = [1, 1]} : vector<3x128xf32> to vector<1x128xf32>
    %8 = vector.broadcast %6 : vector<8x1xf32> to vector<8x128xf32>
    %9 = vector.broadcast %7 : vector<1x128xf32> to vector<8x128xf32>
    %10 = arith.subf %8, %9 : vector<8x128xf32>
    %11 = arith.mulf %10, %10 : vector<8x128xf32>
    %12 = arith.addf %5, %11 : vector<8x128xf32>
    %13 = vector.extract_strided_slice %3 {offsets = [0, 1], sizes = [8, 1], strides = [1, 1]} : vector<8x3xf32> to vector<8x1xf32>
    %14 = vector.extract_strided_slice %1 {offsets = [1, 0], sizes = [1, 128], strides = [1, 1]} : vector<3x128xf32> to vector<1x128xf32>
    %15 = vector.broadcast %13 : vector<8x1xf32> to vector<8x128xf32>
    %16 = vector.broadcast %14 : vector<1x128xf32> to vector<8x128xf32>
    %17 = arith.subf %15, %16 : vector<8x128xf32>
    %18 = arith.mulf %17, %17 : vector<8x128xf32>
    %19 = arith.addf %12, %18 : vector<8x128xf32>
    %20 = vector.extract_strided_slice %3 {offsets = [0, 2], sizes = [8, 1], strides = [1, 1]} : vector<8x3xf32> to vector<8x1xf32>
    %21 = vector.extract_strided_slice %1 {offsets = [2, 0], sizes = [1, 128], strides = [1, 1]} : vector<3x128xf32> to vector<1x128xf32>
    %22 = vector.broadcast %20 : vector<8x1xf32> to vector<8x128xf32>
    %23 = vector.broadcast %21 : vector<1x128xf32> to vector<8x128xf32>
    %24 = arith.subf %22, %23 : vector<8x128xf32>
    %25 = arith.mulf %24, %24 : vector<8x128xf32>
    %26 = arith.addf %19, %25 : vector<8x128xf32>
    %27 = vector.broadcast %4 : f32 to vector<8x128xf32>
    %28 = arith.cmpf olt, %26, %27 : vector<8x128xf32>
    %29 = tpu.iota {dimensions = array<i32: 1>} : vector<8x128xi32>
    %30 = arith.extui %28 : vector<8x128xi1> to vector<8x128xi32>
    %31 = arith.sitofp %30 : vector<8x128xi32> to vector<8x128xf32>
    %c1_i32 = arith.constant 1 : i32
    %32 = tpu.dynamic_rotate %31 by %c1_i32 dim 1 : vector<8x128xf32>, i32 -> vector<8x128xf32>
    %c1_i32_7 = arith.constant 1 : i32
    %33 = vector.broadcast %c1_i32_7 : i32 to vector<8x128xi32>
    %34 = arith.cmpi sge, %29, %33 : vector<8x128xi32>
    %cst_8 = arith.constant 0.000000e+00 : f32
    %35 = vector.broadcast %cst_8 : f32 to vector<8x128xf32>
    %36 = arith.select %34, %32, %35 : vector<8x128xi1>, vector<8x128xf32>
    %37 = arith.addf %31, %36 : vector<8x128xf32>
    %c2_i32 = arith.constant 2 : i32
    %38 = tpu.dynamic_rotate %37 by %c2_i32 dim 1 : vector<8x128xf32>, i32 -> vector<8x128xf32>
    %c2_i32_9 = arith.constant 2 : i32
    %39 = vector.broadcast %c2_i32_9 : i32 to vector<8x128xi32>
    %40 = arith.cmpi sge, %29, %39 : vector<8x128xi32>
    %cst_10 = arith.constant 0.000000e+00 : f32
    %41 = vector.broadcast %cst_10 : f32 to vector<8x128xf32>
    %42 = arith.select %40, %38, %41 : vector<8x128xi1>, vector<8x128xf32>
    %43 = arith.addf %37, %42 : vector<8x128xf32>
    %c4_i32 = arith.constant 4 : i32
    %44 = tpu.dynamic_rotate %43 by %c4_i32 dim 1 : vector<8x128xf32>, i32 -> vector<8x128xf32>
    %c4_i32_11 = arith.constant 4 : i32
    %45 = vector.broadcast %c4_i32_11 : i32 to vector<8x128xi32>
    %46 = arith.cmpi sge, %29, %45 : vector<8x128xi32>
    %cst_12 = arith.constant 0.000000e+00 : f32
    %47 = vector.broadcast %cst_12 : f32 to vector<8x128xf32>
    %48 = arith.select %46, %44, %47 : vector<8x128xi1>, vector<8x128xf32>
    %49 = arith.addf %43, %48 : vector<8x128xf32>
    %c8_i32 = arith.constant 8 : i32
    %50 = tpu.dynamic_rotate %49 by %c8_i32 dim 1 : vector<8x128xf32>, i32 -> vector<8x128xf32>
    %c8_i32_13 = arith.constant 8 : i32
    %51 = vector.broadcast %c8_i32_13 : i32 to vector<8x128xi32>
    %52 = arith.cmpi sge, %29, %51 : vector<8x128xi32>
    %cst_14 = arith.constant 0.000000e+00 : f32
    %53 = vector.broadcast %cst_14 : f32 to vector<8x128xf32>
    %54 = arith.select %52, %50, %53 : vector<8x128xi1>, vector<8x128xf32>
    %55 = arith.addf %49, %54 : vector<8x128xf32>
    %c16_i32 = arith.constant 16 : i32
    %56 = tpu.dynamic_rotate %55 by %c16_i32 dim 1 : vector<8x128xf32>, i32 -> vector<8x128xf32>
    %c16_i32_15 = arith.constant 16 : i32
    %57 = vector.broadcast %c16_i32_15 : i32 to vector<8x128xi32>
    %58 = arith.cmpi sge, %29, %57 : vector<8x128xi32>
    %cst_16 = arith.constant 0.000000e+00 : f32
    %59 = vector.broadcast %cst_16 : f32 to vector<8x128xf32>
    %60 = arith.select %58, %56, %59 : vector<8x128xi1>, vector<8x128xf32>
    %61 = arith.addf %55, %60 : vector<8x128xf32>
    %c32_i32 = arith.constant 32 : i32
    %62 = tpu.dynamic_rotate %61 by %c32_i32 dim 1 : vector<8x128xf32>, i32 -> vector<8x128xf32>
    %c32_i32_17 = arith.constant 32 : i32
    %63 = vector.broadcast %c32_i32_17 : i32 to vector<8x128xi32>
    %64 = arith.cmpi sge, %29, %63 : vector<8x128xi32>
    %cst_18 = arith.constant 0.000000e+00 : f32
    %65 = vector.broadcast %cst_18 : f32 to vector<8x128xf32>
    %66 = arith.select %64, %62, %65 : vector<8x128xi1>, vector<8x128xf32>
    %67 = arith.addf %61, %66 : vector<8x128xf32>
    %c64_i32 = arith.constant 64 : i32
    %68 = tpu.dynamic_rotate %67 by %c64_i32 dim 1 : vector<8x128xf32>, i32 -> vector<8x128xf32>
    %c64_i32_19 = arith.constant 64 : i32
    %69 = vector.broadcast %c64_i32_19 : i32 to vector<8x128xi32>
    %70 = arith.cmpi sge, %29, %69 : vector<8x128xi32>
    %cst_20 = arith.constant 0.000000e+00 : f32
    %71 = vector.broadcast %cst_20 : f32 to vector<8x128xf32>
    %72 = arith.select %70, %68, %71 : vector<8x128xi1>, vector<8x128xf32>
    %73 = arith.addf %67, %72 : vector<8x128xf32>
    %cst_21 = arith.constant 1.000000e+00 : f32
    %74 = vector.broadcast %cst_21 : f32 to vector<8x128xf32>
    %75 = arith.subf %73, %74 : vector<8x128xf32>
    %76 = vector.extract_strided_slice %73 {offsets = [0, 127], sizes = [8, 1], strides = [1, 1]} : vector<8x128xf32> to vector<8x1xf32>
    %cst_22 = arith.constant 5.000000e-01 : f32
    %77 = vector.broadcast %cst_22 : f32 to vector<8x1xf32>
    %78 = arith.cmpf ole, %76, %77 : vector<8x1xf32>
    %c0_i32 = arith.constant 0 : i32
    %79 = vector.broadcast %c0_i32 : i32 to vector<8x128xi32>
    %80 = arith.cmpi eq, %29, %79 : vector<8x128xi32>
    %81 = vector.broadcast %78 : vector<8x1xi1> to vector<8x128xi1>
    %82 = arith.andi %81, %80 : vector<8x128xi1>
    %cst_23 = arith.constant 0.000000e+00 : f32
    %83 = vector.broadcast %cst_23 : f32 to vector<8x128xf32>
    %84 = arith.select %82, %83, %75 : vector<8x128xi1>, vector<8x128xf32>
    %85 = arith.ori %28, %82 : vector<8x128xi1>
    %86 = tpu.iota {dimensions = array<i32: 1>} : vector<8x16xi32>
    %87 = arith.sitofp %86 : vector<8x16xi32> to vector<8x16xf32>
    %88 = vector.broadcast %76 : vector<8x1xf32> to vector<8x16xf32>
    %89 = arith.cmpf olt, %87, %88 : vector<8x16xf32>
    %cst_24 = arith.constant 0.000000e+00 : f32
    %90 = vector.broadcast %cst_24 : f32 to vector<8x16xf32>
    %91 = arith.select %89, %87, %90 : vector<8x16xi1>, vector<8x16xf32>
    %92 = vector.shape_cast %84 : vector<8x128xf32> to vector<8x1x128xf32>
    %93 = vector.shape_cast %91 : vector<8x16xf32> to vector<8x16x1xf32>
    %94 = vector.broadcast %92 : vector<8x1x128xf32> to vector<8x16x128xf32>
    %95 = vector.broadcast %93 : vector<8x16x1xf32> to vector<8x16x128xf32>
    %96 = arith.cmpf oeq, %94, %95 : vector<8x16x128xf32>
    %97 = vector.shape_cast %85 : vector<8x128xi1> to vector<8x1x128xi1>
    %98 = vector.broadcast %97 : vector<8x1x128xi1> to vector<8x16x128xi1>
    %99 = arith.andi %96, %98 : vector<8x16x128xi1>
    %100 = arith.extui %99 : vector<8x16x128xi1> to vector<8x16x128xi32>
    %101 = arith.sitofp %100 : vector<8x16x128xi32> to vector<8x16x128xf32>
    %102 = arith.truncf %101 : vector<8x16x128xf32> to vector<8x16x128xbf16>
    %103 = vector.shape_cast %102 : vector<8x16x128xbf16> to vector<128x128xbf16>
    %c0_25 = arith.constant 0 : index
    %c0_26 = arith.constant 0 : index
    %c0_27 = arith.constant 0 : index
    %104 = vector.load %arg5[%c0_25, %c0_26, %c0_27] : memref<1x8x128xbf16, #tpu.memory_space<vmem>>, vector<1x8x128xbf16>
    %105 = vector.shape_cast %104 : vector<1x8x128xbf16> to vector<8x128xbf16>
    %cst_28 = arith.constant dense<0.000000e+00> : vector<8x128xf32>
    %106 = tpu.matmul %105, %103, %cst_28 {dimension_numbers = #tpu.dot_dimension_numbers<[1], [1], [0], [0], [0, 0, 1, 0], [], []>} : vector<8x128xbf16>, vector<128x128xbf16>, vector<8x128xf32> -> vector<8x128xf32>
    %c0_29 = arith.constant 0 : index
    %c0_30 = arith.constant 0 : index
    %c0_31 = arith.constant 0 : index
    %107 = vector.load %arg6[%c0_29, %c0_30, %c0_31] : memref<1x8x128xbf16, #tpu.memory_space<vmem>>, vector<1x8x128xbf16>
    %108 = vector.shape_cast %107 : vector<1x8x128xbf16> to vector<8x128xbf16>
    %cst_32 = arith.constant dense<0.000000e+00> : vector<8x128xf32>
    %109 = tpu.matmul %108, %103, %cst_32 {dimension_numbers = #tpu.dot_dimension_numbers<[1], [1], [0], [0], [0, 0, 1, 0], [], []>} : vector<8x128xbf16>, vector<128x128xbf16>, vector<8x128xf32> -> vector<8x128xf32>
    %110 = arith.addf %106, %109 : vector<8x128xf32>
    %c0_33 = arith.constant 0 : index
    %c0_34 = arith.constant 0 : index
    %c0_35 = arith.constant 0 : index
    %111 = vector.load %arg4[%c0_33, %c0_34, %c0_35] : memref<1x8x8xf32, #tpu.memory_space<vmem>>, vector<1x8x8xf32>
    %112 = vector.shape_cast %111 : vector<1x8x8xf32> to vector<8x8xf32>
    %113 = tpu.transpose %112, [1, 0] : vector<8x8xf32> -> vector<8x8xf32>
    %114 = arith.truncf %113 : vector<8x8xf32> to vector<8x8xbf16>
    %115 = arith.extf %114 : vector<8x8xbf16> to vector<8x8xf32>
    %116 = arith.subf %113, %115 : vector<8x8xf32>
    %117 = arith.truncf %116 : vector<8x8xf32> to vector<8x8xbf16>
    %118 = tpu.iota {dimensions = array<i32: 1>} : vector<8x128xi32>
    %119 = tpu.iota {dimensions = array<i32: 0>} : vector<8x128xi32>
    %c16_i32_36 = arith.constant 16 : i32
    %120 = vector.broadcast %c16_i32_36 : i32 to vector<8x128xi32>
    %121 = arith.muli %119, %120 : vector<8x128xi32>
    %122 = arith.cmpi sge, %118, %121 : vector<8x128xi32>
    %c1_i32_37 = arith.constant 1 : i32
    %123 = vector.broadcast %c1_i32_37 : i32 to vector<8x128xi32>
    %124 = arith.addi %119, %123 : vector<8x128xi32>
    %c16_i32_38 = arith.constant 16 : i32
    %125 = vector.broadcast %c16_i32_38 : i32 to vector<8x128xi32>
    %126 = arith.muli %124, %125 : vector<8x128xi32>
    %127 = arith.cmpi slt, %118, %126 : vector<8x128xi32>
    %128 = arith.andi %122, %127 : vector<8x128xi1>
    %129 = arith.extui %128 : vector<8x128xi1> to vector<8x128xi32>
    %130 = arith.sitofp %129 : vector<8x128xi32> to vector<8x128xf32>
    %131 = arith.truncf %130 : vector<8x128xf32> to vector<8x128xbf16>
    %cst_39 = arith.constant dense<0.000000e+00> : vector<8x128xf32>
    %132 = tpu.matmul %114, %131, %cst_39 {dimension_numbers = #tpu.dot_dimension_numbers<[1], [0], [0], [1], [0, 0, 1, 1], [], []>} : vector<8x8xbf16>, vector<8x128xbf16>, vector<8x128xf32> -> vector<8x128xf32>
    %cst_40 = arith.constant dense<0.000000e+00> : vector<8x128xf32>
    %133 = tpu.matmul %117, %131, %cst_40 {dimension_numbers = #tpu.dot_dimension_numbers<[1], [0], [0], [1], [0, 0, 1, 1], [], []>} : vector<8x8xbf16>, vector<8x128xbf16>, vector<8x128xf32> -> vector<8x128xf32>
    %134 = arith.addf %132, %133 : vector<8x128xf32>
    %135 = arith.subf %110, %134 : vector<8x128xf32>
    %c0_41 = arith.constant 0 : index
    %c0_42 = arith.constant 0 : index
    %c0_43 = arith.constant 0 : index
    %136 = vector.load %arg7[%c0_41, %c0_42, %c0_43] : memref<1x8x128xf32, #tpu.memory_space<vmem>>, vector<1x8x128xf32>
    %137 = vector.shape_cast %136 : vector<1x8x128xf32> to vector<8x128xf32>
    %138 = vector.shape_cast %135 : vector<8x128xf32> to vector<1x8x128xf32>
    tpu.vector_store %arg7[%c0_41, %c0_42, %c0_43], %138 {strides = array<i32>} : memref<1x8x128xf32, #tpu.memory_space<vmem>>, vector<1x8x128xf32>,
    return
  }
  func.func @transform_0(%arg0: i32, %arg1: i32) -> (i32, i32, i32) {
    %c0_i32 = arith.constant 0 : i32
    %c0_i32_0 = arith.constant 0 : i32
    %c0_i32_1 = arith.constant 0 : i32
    return %arg0, %c0_i32, %c0_i32_0 : i32, i32, i32
  }
  func.func @transform_1(%arg0: i32, %arg1: i32) -> (i32, i32, i32) {
    %c0_i32 = arith.constant 0 : i32
    %c0_i32_0 = arith.constant 0 : i32
    return %arg0, %arg1, %c0_i32 : i32, i32, i32
  }
  func.func @transform_2(%arg0: i32, %arg1: i32) -> (i32, i32, i32) {
    %c0_i32 = arith.constant 0 : i32
    %c0_i32_0 = arith.constant 0 : i32
    return %arg0, %arg1, %c0_i32 : i32, i32, i32
  }
  func.func @transform_3(%arg0: i32, %arg1: i32) -> (i32, i32, i32) {
    %c0_i32 = arith.constant 0 : i32
    %c0_i32_0 = arith.constant 0 : i32
    %c0_i32_1 = arith.constant 0 : i32
    return %arg0, %c0_i32, %c0_i32_0 : i32, i32, i32
  }
  func.func @transform_4(%arg0: i32, %arg1: i32) -> (i32, i32, i32) {
    %c0_i32 = arith.constant 0 : i32
    %c0_i32_0 = arith.constant 0 : i32
    %c0_i32_1 = arith.constant 0 : i32
    return %arg0, %c0_i32, %c0_i32_0 : i32, i32, i32
  }
  func.func @transform_5(%arg0: i32, %arg1: i32) -> (i32, i32, i32) {
    %c0_i32 = arith.constant 0 : i32
    %c0_i32_0 = arith.constant 0 : i32
    return %arg0, %c0_i32, %arg1 : i32, i32, i32
  }
}

</mosaic_0001>

<llo_original>
// kernel: tpu_custom_call.1
$region0: #{tpu_custom_call.1}
  #allocation0 [shape = 'u32[]', space=smem, size = 0x4, offset = 0x4, fixed_abs, tag = 'smem constant byte address 0x4 - core index']
  #allocation1 [shape = 'u32[144,128]{1,0:T(1,128)}', space=vmem, size = 0x12000, scoped, tag = 'internal scratch']
  %s0 = inlined_call_operand.vmem [shape: f32[2,3,128], index: 0, kind: input, shape index: {}]
  %s1 = inlined_call_operand.vmem [shape: f32[2,16,3], index: 1, kind: input, shape index: {}]
  %s2 = inlined_call_operand.vmem [shape: f32[2,16,8], index: 2, kind: input, shape index: {}]
  %s3 = inlined_call_operand.vmem [shape: bf16[2,8,128], index: 3, kind: input, shape index: {}]
  %s4 = inlined_call_operand.vmem [shape: bf16[2,8,128], index: 4, kind: input, shape index: {}]
  %s5 = inlined_call_operand.hbm [shape: f32[2,8,256], index: 5, kind: output, shape index: {}]
  %s6 = sld [smem:[#allocation0]]
  $region53: #{tpu_custom_call.1} parent=0
    _
  %s8 = ssub.s32 1, %s6
  %s9 = scalar_select 0, %s8, %s6
  $region1: #{tpu_custom_call.1} parent=0
    #allocation2 [shape = 'u8[8192]{0}', space=vmem, size = 0x2000, scoped, tag = 'output window, operand 0']
    #allocation3 [shape = 's32[2]{0}', space=sflag, size = 0x8, scoped, tag = 'scoped memory for tpu_custom_call.1']
    %10 = vsyncpa [#allocation3], 0
    %s11 = scalar_lea.sflag [#allocation3], 1
    %12 = vsyncpa %s11, 0
    loop: start=0, step=1, limit=6
    $region2: #{tpu_custom_call.1} parent=1 // loop_pre_header
      _
    $region3: #{tpu_custom_call.1} parent=1 // loop_header
      %s14 = sphi 0, %s18
      %p15 = scmp.ge.s32.totalorder %s14, 6
      %s21 = sphi 0, %s33
      %s22 = sphi 0, %s29
      %s23 = sphi 0, %s21
      %s24 = sphi 0, %s22
      %s25 = sphi 0, %s23
      %s26 = sphi 0, %s24
      %s36 = sphi 0, %s38
      %s39 = sphi 0, %s36
      %s40 = sphi 0, %s39
      %s56 = sphi 0, %s40
      %s64 = sphi 0, %s66
      %s67 = sphi 0, %s64
      %s68 = sphi 0, %s67
      %s84 = sphi 0, %s68
      %s92 = sphi 0, %s94
      %s95 = sphi 0, %s92
      %s96 = sphi 0, %s95
      %s112 = sphi 0, %s96
      %s118 = sphi 0, %s120
      %s121 = sphi 0, %s118
      %s122 = sphi 0, %s121
      %s138 = sphi 0, %s122
      %s144 = sphi 0, %s146
      %s147 = sphi 0, %s144
      %s148 = sphi 0, %s147
      %s164 = sphi 0, %s148
      %s172 = sphi 0, %s174
      %s175 = sphi 0, %s172
      %s176 = sphi 0, %s175
      %s192 = sphi 0, %s176
    $region4: #{tpu_custom_call.1} parent=1 // loop_header_branch
      %17 = sbr.rel (%p15) target = $region8
    $region5: #{tpu_custom_call.1} parent=1 // loop_body
      %s19 = ssub.s32 %s14, 1
      %s20 = ssub.s32 %s14, 2
      %s27 = sadd.s32 1, %s22
      %p28 = scmp.ge.s32.totalorder %s27, 2
      %s29 = scalar_select %p28, 0, %s27
      %s30 = sadd.s32 1, %s21
      %s31 = scalar_select %p28, %s30, %s21
      %p32 = scmp.ge.s32.totalorder %s31, 2
      %s33 = scalar_select %p32, 0, %s31
      %s34 = ssub.s32 %s21, %s33
      %p35 = scmp.eq.s32.totalorder %s34, 0
      %s37 = sadd.s32 %s36, 1
      %s38 = scalar_select %p35, %s36, %s37
      %p41 = pneg %p35
      %p42 = scmp.eq.s32.totalorder %s14, 3
      %p43 = por %p41, %p42
      %p44 = scmp.ne.s32.totalorder %s36, %s39
      %p45 = scmp.eq.s32.totalorder %s14, 0
      %p46 = por %p44, %p45
      %p47 = scmp.ne.s32.totalorder %s36, %s39
      %p48 = scmp.eq.s32.totalorder %s19, 3
      %p49 = por %p47, %p48
      %p50 = scmp.ne.s32.totalorder %s39, %s40
      %p51 = scmp.eq.s32.totalorder %s19, 0
      %p52 = por %p50, %p51
      %p53 = scmp.ne.s32.totalorder %s39, %s40
      %p54 = scmp.eq.s32.totalorder %s20, 3
      %p55 = por %p53, %p54
      %p57 = scmp.ne.s32.totalorder %s40, %s56
      %p58 = scmp.eq.s32.totalorder %s20, 0
      %p59 = por %p57, %p58
      %s60 = ssub.s32 %s21, %s33
      %s61 = ssub.s32 %s22, %s29
      %s62 = sor.u32 %s60, %s61
      %p63 = scmp.eq.s32.totalorder %s62, 0
      %s65 = sadd.s32 %s64, 1
      %s66 = scalar_select %p63, %s64, %s65
      %p69 = pneg %p63
      %p70 = scmp.eq.s32.totalorder %s14, 3
      %p71 = por %p69, %p70
      %p72 = scmp.ne.s32.totalorder %s64, %s67
      %p73 = scmp.eq.s32.totalorder %s14, 0
      %p74 = por %p72, %p73
      %p75 = scmp.ne.s32.totalorder %s64, %s67
      %p76 = scmp.eq.s32.totalorder %s19, 3
      %p77 = por %p75, %p76
      %p78 = scmp.ne.s32.totalorder %s67, %s68
      %p79 = scmp.eq.s32.totalorder %s19, 0
      %p80 = por %p78, %p79
      %p81 = scmp.ne.s32.totalorder %s67, %s68
      %p82 = scmp.eq.s32.totalorder %s20, 3
      %p83 = por %p81, %p82
      %p85 = scmp.ne.s32.totalorder %s68, %s84
      %p86 = scmp.eq.s32.totalorder %s20, 0
      %p87 = por %p85, %p86
      %s88 = ssub.s32 %s21, %s33
      %s89 = ssub.s32 %s22, %s29
      %s90 = sor.u32 %s88, %s89
      %p91 = scmp.eq.s32.totalorder %s90, 0
      %s93 = sadd.s32 %s92, 1
      %s94 = scalar_select %p91, %s92, %s93
      %p97 = pneg %p91
      %p98 = scmp.eq.s32.totalorder %s14, 3
      %p99 = por %p97, %p98
      %p100 = scmp.ne.s32.totalorder %s92, %s95
      %p101 = scmp.eq.s32.totalorder %s14, 0
      %p102 = por %p100, %p101
      %p103 = scmp.ne.s32.totalorder %s92, %s95
      %p104 = scmp.eq.s32.totalorder %s19, 3
      %p105 = por %p103, %p104
      %p106 = scmp.ne.s32.totalorder %s95, %s96
      %p107 = scmp.eq.s32.totalorder %s19, 0
      %p108 = por %p106, %p107
      %p109 = scmp.ne.s32.totalorder %s95, %s96
      %p110 = scmp.eq.s32.totalorder %s20, 3
      %p111 = por %p109, %p110
      %p113 = scmp.ne.s32.totalorder %s96, %s112
      %p114 = scmp.eq.s32.totalorder %s20, 0
      %p115 = por %p113, %p114
      %s116 = ssub.s32 %s21, %s33
      %p117 = scmp.eq.s32.totalorder %s116, 0
      %s119 = sadd.s32 %s118, 1
      %s120 = scalar_select %p117, %s118, %s119
      %p123 = pneg %p117
      %p124 = scmp.eq.s32.totalorder %s14, 3
      %p125 = por %p123, %p124
      %p126 = scmp.ne.s32.totalorder %s118, %s121
      %p127 = scmp.eq.s32.totalorder %s14, 0
      %p128 = por %p126, %p127
      %p129 = scmp.ne.s32.totalorder %s118, %s121
      %p130 = scmp.eq.s32.totalorder %s19, 3
      %p131 = por %p129, %p130
      %p132 = scmp.ne.s32.totalorder %s121, %s122
      %p133 = scmp.eq.s32.totalorder %s19, 0
      %p134 = por %p132, %p133
      %p135 = scmp.ne.s32.totalorder %s121, %s122
      %p136 = scmp.eq.s32.totalorder %s20, 3
      %p137 = por %p135, %p136
      %p139 = scmp.ne.s32.totalorder %s122, %s138
      %p140 = scmp.eq.s32.totalorder %s20, 0
      %p141 = por %p139, %p140
      %s142 = ssub.s32 %s21, %s33
      %p143 = scmp.eq.s32.totalorder %s142, 0
      %s145 = sadd.s32 %s144, 1
      %s146 = scalar_select %p143, %s144, %s145
      %p149 = pneg %p143
      %p150 = scmp.eq.s32.totalorder %s14, 3
      %p151 = por %p149, %p150
      %p152 = scmp.ne.s32.totalorder %s144, %s147
      %p153 = scmp.eq.s32.totalorder %s14, 0
      %p154 = por %p152, %p153
      %p155 = scmp.ne.s32.totalorder %s144, %s147
      %p156 = scmp.eq.s32.totalorder %s19, 3
      %p157 = por %p155, %p156
      %p158 = scmp.ne.s32.totalorder %s147, %s148
      %p159 = scmp.eq.s32.totalorder %s19, 0
      %p160 = por %p158, %p159
      %p161 = scmp.ne.s32.totalorder %s147, %s148
      %p162 = scmp.eq.s32.totalorder %s20, 3
      %p163 = por %p161, %p162
      %p165 = scmp.ne.s32.totalorder %s148, %s164
      %p166 = scmp.eq.s32.totalorder %s20, 0
      %p167 = por %p165, %p166
      %s168 = ssub.s32 %s21, %s33
      %s169 = ssub.s32 %s22, %s29
      %s170 = sor.u32 %s168, %s169
      %p171 = scmp.eq.s32.totalorder %s170, 0
      %s173 = sadd.s32 %s172, 1
      %s174 = scalar_select %p171, %s172, %s173
      %p177 = pneg %p171
      %p178 = scmp.eq.s32.totalorder %s14, 3
      %p179 = por %p177, %p178
      %p180 = scmp.ne.s32.totalorder %s172, %s175
      %p181 = scmp.eq.s32.totalorder %s14, 0
      %p182 = por %p180, %p181
      %p183 = scmp.ne.s32.totalorder %s172, %s175
      %p184 = scmp.eq.s32.totalorder %s19, 3
      %p185 = por %p183, %p184
      %p186 = scmp.ne.s32.totalorder %s175, %s176
      %p187 = scmp.eq.s32.totalorder %s19, 0
      %p188 = por %p186, %p187
      %p189 = scmp.ne.s32.totalorder %s175, %s176
      %p190 = scmp.eq.s32.totalorder %s20, 3
      %p191 = por %p189, %p190
      %p193 = scmp.ne.s32.totalorder %s176, %s192
      %p194 = scmp.eq.s32.totalorder %s20, 0
      %p195 = por %p193, %p194
      %p196 = scmp.le.s32.totalorder 1, %s14
      %p197 = scmp.lt.s32.totalorder %s14, 5
      %p198 = pnand %p196, %p197
      %p199 = pneg %p198
      // Predicated region
      $region9: #{tpu_custom_call.1} parent=5 // pred_check
        _
      $region10: #{tpu_custom_call.1} parent=5 // pred_check_branch
        %201 = sbr.rel (%p198) target = $region12
      $region11: #{tpu_custom_call.1} parent=5 // pred_region
        %s202 = ssub.s32 %s14, 1
      $region12: #{tpu_custom_call.1} parent=5 // pred_fallthru
        _
      %p203 = scmp.lt.s32.totalorder %s14, 4
      // Predicated region
      $region13: #{tpu_custom_call.1} parent=5 // pred_check
        %p204 = pneg %p203
      $region14: #{tpu_custom_call.1} parent=5 // pred_check_branch
        %206 = sbr.rel (%p204) target = $region16
      $region15: #{tpu_custom_call.1} parent=5 // pred_region
        // Predicated region
        $region17: #{tpu_custom_call.1} parent=15 // pred_check
          %p207 = pneg %p46
        $region18: #{tpu_custom_call.1} parent=15 // pred_check_branch
          %209 = sbr.rel (%p207) target = $region20
        $region19: #{tpu_custom_call.1} parent=15 // pred_region
          %p210 = scmp.lt.s32.totalorder %s21, 1
          %s211 = scalar_select %p210, %s21, 1
          %s212 = smul.addr %s211, 4
          %s213 = scalar_lea.vmem %s0, %s212
        $region20: #{tpu_custom_call.1} parent=15 // pred_fallthru
          _
        // Predicated region
        $region21: #{tpu_custom_call.1} parent=15 // pred_check
          %p214 = pneg %p74
        $region22: #{tpu_custom_call.1} parent=15 // pred_check_branch
          %216 = sbr.rel (%p214) target = $region24
        $region23: #{tpu_custom_call.1} parent=15 // pred_region
          %p217 = scmp.lt.s32.totalorder %s21, 1
          %s218 = scalar_select %p217, %s21, 1
          %p219 = scmp.lt.s32.totalorder %s22, 1
          %s220 = scalar_select %p219, %s22, 1
          %s221 = smul.addr %s218, 2
          %s222 = sadd.s32 %s220, %s221
          %s223 = smul.addr %s222, 8
          %s224 = scalar_lea.vmem %s1, %s223
        $region24: #{tpu_custom_call.1} parent=15 // pred_fallthru
          _
        // Predicated region
        $region25: #{tpu_custom_call.1} parent=15 // pred_check
          %p225 = pneg %p102
        $region26: #{tpu_custom_call.1} parent=15 // pred_check_branch
          %227 = sbr.rel (%p225) target = $region28
        $region27: #{tpu_custom_call.1} parent=15 // pred_region
          %p228 = scmp.lt.s32.totalorder %s21, 1
          %s229 = scalar_select %p228, %s21, 1
          %p230 = scmp.lt.s32.totalorder %s22, 1
          %s231 = scalar_select %p230, %s22, 1
          %s232 = smul.addr %s229, 2
          %s233 = sadd.s32 %s231, %s232
          %s234 = smul.addr %s233, 8
          %s235 = scalar_lea.vmem %s2, %s234
        $region28: #{tpu_custom_call.1} parent=15 // pred_fallthru
          _
        // Predicated region
        $region29: #{tpu_custom_call.1} parent=15 // pred_check
          %p236 = pneg %p128
        $region30: #{tpu_custom_call.1} parent=15 // pred_check_branch
          %238 = sbr.rel (%p236) target = $region32
        $region31: #{tpu_custom_call.1} parent=15 // pred_region
          %p239 = scmp.lt.s32.totalorder %s21, 1
          %s240 = scalar_select %p239, %s21, 1
          %s241 = smul.addr %s240, 4
          %s242 = scalar_lea.vmem %s3, %s241
        $region32: #{tpu_custom_call.1} parent=15 // pred_fallthru
          _
        // Predicated region
        $region33: #{tpu_custom_call.1} parent=15 // pred_check
          %p243 = pneg %p154
        $region34: #{tpu_custom_call.1} parent=15 // pred_check_branch
          %245 = sbr.rel (%p243) target = $region36
        $region35: #{tpu_custom_call.1} parent=15 // pred_region
          %p246 = scmp.lt.s32.totalorder %s21, 1
          %s247 = scalar_select %p246, %s21, 1
          %s248 = smul.addr %s247, 4
          %s249 = scalar_lea.vmem %s4, %s248
        $region36: #{tpu_custom_call.1} parent=15 // pred_fallthru
          _
      $region16: #{tpu_custom_call.1} parent=5 // pred_fallthru
        _
      %p250 = scmp.le.s32.totalorder 1, %s14
      %p251 = scmp.lt.s32.totalorder %s14, 5
      %p252 = pnand %p250, %p251
      %p253 = pneg %p252
      // Predicated region
      $region37: #{tpu_custom_call.1} parent=5 // pred_check
        _
      $region38: #{tpu_custom_call.1} parent=5 // pred_check_branch
        %255 = sbr.rel (%p252) target = $region40
      $region39: #{tpu_custom_call.1} parent=5 // pred_region
        %s256 = ssub.s32 %s14, 1
        %p257 = scmp.lt.s32.totalorder %s23, 1
        %s258 = scalar_select %p257, %s23, 1
        %s259 = smul.addr %s258, 4
        %s260 = scalar_lea.vmem %s0, %s259
        %p261 = pneg %p52
        %p262 = pneg %p49
        %p263 = scmp.lt.s32.totalorder %s23, 1
        %s264 = scalar_select %p263, %s23, 1
        %p265 = scmp.lt.s32.totalorder %s24, 1
        %s266 = scalar_select %p265, %s24, 1
        %s267 = smul.addr %s264, 2
        %s268 = sadd.s32 %s266, %s267
        %s269 = smul.addr %s268, 8
        %s270 = scalar_lea.vmem %s1, %s269
        %p271 = pneg %p80
        %p272 = pneg %p77
        %p273 = scmp.lt.s32.totalorder %s23, 1
        %s274 = scalar_select %p273, %s23, 1
        %p275 = scmp.lt.s32.totalorder %s24, 1
        %s276 = scalar_select %p275, %s24, 1
        %s277 = smul.addr %s274, 2
        %s278 = sadd.s32 %s276, %s277
        %s279 = smul.addr %s278, 8
        %s280 = scalar_lea.vmem %s2, %s279
        %p281 = pneg %p108
        %p282 = pneg %p105
        %p283 = scmp.lt.s32.totalorder %s23, 1
        %s284 = scalar_select %p283, %s23, 1
        %s285 = smul.addr %s284, 4
        %s286 = scalar_lea.vmem %s3, %s285
        %p287 = pneg %p134
        %p288 = pneg %p131
        %p289 = scmp.lt.s32.totalorder %s23, 1
        %s290 = scalar_select %p289, %s23, 1
        %s291 = smul.addr %s290, 4
        %s292 = scalar_lea.vmem %s4, %s291
        %p293 = pneg %p160
        %p294 = pneg %p157
        %p295 = pneg %p188
        %p296 = pneg %p185
        %s297 = sand.u32 %s175, 1
        %s298 = scalar_lea.sflag [#allocation3], %s297
        %s299 = sand.u32 %s175, 1
        %s300 = smul.addr %s299, 8
        %s301 = scalar_lea.vmem [#allocation2], %s300
        %p302 = scmp.lt.s32.totalorder %s23, 1
        %s303 = scalar_select %p302, %s23, 1
        %s304 = smul.addr %s303, 4
        %s305 = scalar_lea.vmem %s0, %s304
        %p306 = scmp.lt.s32.totalorder %s23, 1
        %s307 = scalar_select %p306, %s23, 1
        %p308 = scmp.lt.s32.totalorder %s24, 1
        %s309 = scalar_select %p308, %s24, 1
        %s310 = smul.addr %s307, 2
        %s311 = sadd.s32 %s309, %s310
        %s312 = smul.addr %s311, 8
        %s313 = scalar_lea.vmem %s1, %s312
        %p314 = scmp.lt.s32.totalorder %s23, 1
        %s315 = scalar_select %p314, %s23, 1
        %p316 = scmp.lt.s32.totalorder %s24, 1
        %s317 = scalar_select %p316, %s24, 1
        %s318 = smul.addr %s315, 2
        %s319 = sadd.s32 %s317, %s318
        %s320 = smul.addr %s319, 8
        %s321 = scalar_lea.vmem %s2, %s320
        %p322 = scmp.lt.s32.totalorder %s23, 1
        %s323 = scalar_select %p322, %s23, 1
        %s324 = smul.addr %s323, 4
        %s325 = scalar_lea.vmem %s3, %s324
        %p326 = scmp.lt.s32.totalorder %s23, 1
        %s327 = scalar_select %p326, %s23, 1
        %s328 = smul.addr %s327, 4
        %s329 = scalar_lea.vmem %s4, %s328
        %v331 = vld [vmem:[%s305] sm:$0x7]
        %v332 = vld [vmem:[%s313] sm:$0xff]
        %334 = vset.pattern.permute.xlu0 0
        %335 = vperm.xlu0 %334, %v332
        %v336 = vpop.permute.xlu0 %335
        %v338 = vlaneseq
        %v339 = vshrl.u32 %v338, 7
        %v340 = vsub.s32 0, %v339
        %v341 = vrot.slane %v331, %v340
        %v342 = vsub.f32 %v336, %v341
        %v343 = vmul.f32 %v342, %v342
        %v344 = vadd.f32 %v343, 0.0
        %345 = vset.pattern.permute.xlu0 1
        %346 = vperm.xlu0 %345, %v332
        %v347 = vpop.permute.xlu0 %346
        %v349 = vlaneseq
        %v350 = vshrl.u32 %v349, 7
        %v351 = vsub.s32 1, %v350
        %v352 = vrot.slane %v331, %v351
        %v353 = vsub.f32 %v347, %v352
        %v354 = vmul.f32 %v353, %v353
        %v355 = vadd.f32 %v344, %v354
        %356 = vset.pattern.permute.xlu0 2
        %357 = vperm.xlu0 %356, %v332
        %v358 = vpop.permute.xlu0 %357
        %v360 = vlaneseq
        %v361 = vshrl.u32 %v360, 7
        %v362 = vsub.s32 2, %v361
        %v363 = vrot.slane %v331, %v362
        %v364 = vsub.f32 %v358, %v363
        %v365 = vmul.f32 %v364, %v364
        %v366 = vadd.f32 %v355, %v365
        %vm367 = vcmp.lt.f32.partialorder %v366, 0.09
        %v368 = vlaneseq
        %v369 = vand.u32 %v368, 127
        %v370 = vsel %vm367, 1, 0
        %v371 = vcvt.s32.f32 %v370
        %372 = vrot.lane.b32.xlu0 %v371, 1
        %v373 = vpop.permute.xlu0 %372
        %vm374 = vcmp.ge.s32.totalorder %v369, 1
        %v375 = vsel %vm374, %v373, 0.0
        %v376 = vadd.f32 %v371, %v375
        %377 = vrot.lane.b32.xlu0 %v376, 2
        %v378 = vpop.permute.xlu0 %377
        %vm379 = vcmp.ge.s32.totalorder %v369, 2
        %v380 = vsel %vm379, %v378, 0.0
        %v381 = vadd.f32 %v376, %v380
        %382 = vrot.lane.b32.xlu0 %v381, 4
        %v383 = vpop.permute.xlu0 %382
        %vm384 = vcmp.ge.s32.totalorder %v369, 4
        %v385 = vsel %vm384, %v383, 0.0
        %v386 = vadd.f32 %v381, %v385
        %387 = vrot.lane.b32.xlu0 %v386, 8
        %v388 = vpop.permute.xlu0 %387
        %vm389 = vcmp.ge.s32.totalorder %v369, 8
        %v390 = vsel %vm389, %v388, 0.0
        %v391 = vadd.f32 %v386, %v390
        %392 = vrot.lane.b32.xlu0 %v391, 16
        %v393 = vpop.permute.xlu0 %392
        %vm394 = vcmp.ge.s32.totalorder %v369, 16
        %v395 = vsel %vm394, %v393, 0.0
        %v396 = vadd.f32 %v391, %v395
        %397 = vrot.lane.b32.xlu0 %v396, 32
        %v398 = vpop.permute.xlu0 %397
        %vm399 = vcmp.ge.s32.totalorder %v369, 32
        %v400 = vsel %vm399, %v398, 0.0
        %v401 = vadd.f32 %v396, %v400
        %402 = vrot.lane.b32.xlu0 %v401, 64
        %v403 = vpop.permute.xlu0 %402
        %vm404 = vcmp.ge.s32.totalorder %v369, 64
        %v405 = vsel %vm404, %v403, 0.0
        %v406 = vadd.f32 %v401, %v405
        %v407 = vsub.f32 %v406, 1.0
        %vm408 = vcmp.le.f32.partialorder %v406, 0.5
        %vm409 = vcmp.eq.s32.totalorder %v369, 0
        %v410 = vsel %vm408, 1, 0
        %411 = vset.pattern.permute.xlu0 127
        %412 = vperm.xlu0 %411, %v410
        %v413 = vpop.permute.xlu0 %412
        %vm414 = vcmp.eq.s32.totalorder %v413, 1
        %vm415 = vmand %vm414, %vm409
        %v416 = vsel %vm415, 0.0, %v407
        %vm417 = vmor %vm367, %vm415
        %v418 = vcvt.s32.f32 %v369
        %420 = vset.pattern.permute.xlu0 127
        %421 = vperm.xlu0 %420, %v406
        %v422 = vpop.permute.xlu0 %421
        %vm424 = vcmp.lt.f32.partialorder %v418, %v422
        %v425 = vsel %vm424, %v418, 0.0
        %v427 = vcombine.high %v416, %v416
        %v429 = vunpack.c.l.s4 1966171168
        %v430 = vunpack.c.0.s8 %v429
        %v431 = vlaneseq
        %v432 = vshrl.u32 %v431, 7
        %v433 = vsub.s32 %v430, %v432
        %v434 = vrot.slane %v416, %v433
        %v436 = vunpack.c.l.s4 1966171168
        %v437 = vunpack.c.0.s8 %v436
        %v438 = vlaneseq
        %v439 = vshrl.u32 %v438, 7
        %v440 = vsub.s32 %v437, %v439
        %v441 = vrot.slane %v427, %v440
        %v442 = vcombine.high %v434, %v434
        %v443 = vcombine.high %v441, %v441
        %v445 = vunpack.c.l.s4 1966171168
        %v446 = vunpack.c.0.s8 %v445
        %v447 = vlaneseq
        %v448 = vshrl.u32 %v447, 7
        %v449 = vsub.s32 %v446, %v448
        %v450 = vrot.slane %v434, %v449
        %v452 = vunpack.c.l.s4 1966171168
        %v453 = vunpack.c.0.s8 %v452
        %v454 = vlaneseq
        %v455 = vshrl.u32 %v454, 7
        %v456 = vsub.s32 %v453, %v455
        %v457 = vrot.slane %v441, %v456
        %v459 = vunpack.c.l.s4 1966171168
        %v460 = vunpack.c.0.s8 %v459
        %v461 = vlaneseq
        %v462 = vshrl.u32 %v461, 7
        %v463 = vsub.s32 %v460, %v462
        %v464 = vrot.slane %v442, %v463
        %v466 = vunpack.c.l.s4 1966171168
        %v467 = vunpack.c.0.s8 %v466
        %v468 = vlaneseq
        %v469 = vshrl.u32 %v468, 7
        %v470 = vsub.s32 %v467, %v469
        %v471 = vrot.slane %v443, %v470
        %v472 = vcombine.high %v450, %v450
        %v473 = vcombine.high %v457, %v457
        %v474 = vcombine.high %v464, %v464
        %v475 = vcombine.high %v471, %v471
        %v476 = vlaneseq
        %v477 = vshrl.u32 %v476, 7
        %v478 = vsub.s32 0, %v477
        %v479 = vrot.slane %v425, %v478
        %481 = vbcast.lane.b32.xlu0 %v479, 256
        %v482 = vpop.permute.xlu0 %481
        %s484 = sor.u32 256, 8
        %485 = vbcast.lane.b32.xlu0 %v479, %s484
        %v486 = vpop.permute.xlu0 %485
        %v487 = vlaneseq
        %v488 = vshrl.u32 %v487, 7
        %v489 = vsub.s32 1, %v488
        %v490 = vrot.slane %v425, %v489
        %492 = vbcast.lane.b32.xlu0 %v490, 256
        %v493 = vpop.permute.xlu0 %492
        %s495 = sor.u32 256, 8
        %496 = vbcast.lane.b32.xlu0 %v490, %s495
        %v497 = vpop.permute.xlu0 %496
        %v498 = vlaneseq
        %v499 = vshrl.u32 %v498, 7
        %v500 = vsub.s32 2, %v499
        %v501 = vrot.slane %v425, %v500
        %503 = vbcast.lane.b32.xlu0 %v501, 256
        %v504 = vpop.permute.xlu0 %503
        %s506 = sor.u32 256, 8
        %507 = vbcast.lane.b32.xlu0 %v501, %s506
        %v508 = vpop.permute.xlu0 %507
        %v509 = vlaneseq
        %v510 = vshrl.u32 %v509, 7
        %v511 = vsub.s32 3, %v510
        %v512 = vrot.slane %v425, %v511
        %514 = vbcast.lane.b32.xlu0 %v512, 256
        %v515 = vpop.permute.xlu0 %514
        %s517 = sor.u32 256, 8
        %518 = vbcast.lane.b32.xlu0 %v512, %s517
        %v519 = vpop.permute.xlu0 %518
        %v520 = vlaneseq
        %v521 = vshrl.u32 %v520, 7
        %v522 = vsub.s32 4, %v521
        %v523 = vrot.slane %v425, %v522
        %525 = vbcast.lane.b32.xlu0 %v523, 256
        %v526 = vpop.permute.xlu0 %525
        %s528 = sor.u32 256, 8
        %529 = vbcast.lane.b32.xlu0 %v523, %s528
        %v530 = vpop.permute.xlu0 %529
        %v531 = vlaneseq
        %v532 = vshrl.u32 %v531, 7
        %v533 = vsub.s32 5, %v532
        %v534 = vrot.slane %v425, %v533
        %536 = vbcast.lane.b32.xlu0 %v534, 256
        %v537 = vpop.permute.xlu0 %536
        %s539 = sor.u32 256, 8
        %540 = vbcast.lane.b32.xlu0 %v534, %s539
        %v541 = vpop.permute.xlu0 %540
        %v542 = vlaneseq
        %v543 = vshrl.u32 %v542, 7
        %v544 = vsub.s32 6, %v543
        %v545 = vrot.slane %v425, %v544
        %547 = vbcast.lane.b32.xlu0 %v545, 256
        %v548 = vpop.permute.xlu0 %547
        %s550 = sor.u32 256, 8
        %551 = vbcast.lane.b32.xlu0 %v545, %s550
        %v552 = vpop.permute.xlu0 %551
        %v553 = vlaneseq
        %v554 = vshrl.u32 %v553, 7
        %v555 = vsub.s32 7, %v554
        %v556 = vrot.slane %v425, %v555
        %558 = vbcast.lane.b32.xlu0 %v556, 256
        %v559 = vpop.permute.xlu0 %558
        %s561 = sor.u32 256, 8
        %562 = vbcast.lane.b32.xlu0 %v556, %s561
        %v563 = vpop.permute.xlu0 %562
        %v564 = vlaneseq
        %v565 = vshrl.u32 %v564, 7
        %v566 = vsub.s32 0, %v565
        %v567 = vrot.slane %v450, %v566
        %v568 = vlaneseq
        %v569 = vshrl.u32 %v568, 7
        %v570 = vsub.s32 0, %v569
        %v571 = vrot.slane %v464, %v570
        %v572 = vlaneseq
        %v573 = vshrl.u32 %v572, 7
        %v574 = vsub.s32 0, %v573
        %v575 = vrot.slane %v472, %v574
        %v576 = vlaneseq
        %v577 = vshrl.u32 %v576, 7
        %v578 = vsub.s32 0, %v577
        %v579 = vrot.slane %v474, %v578
        %v580 = vlaneseq
        %v581 = vshrl.u32 %v580, 7
        %v582 = vsub.s32 0, %v581
        %v583 = vrot.slane %v457, %v582
        %v584 = vlaneseq
        %v585 = vshrl.u32 %v584, 7
        %v586 = vsub.s32 0, %v585
        %v587 = vrot.slane %v471, %v586
        %v588 = vlaneseq
        %v589 = vshrl.u32 %v588, 7
        %v590 = vsub.s32 0, %v589
        %v591 = vrot.slane %v473, %v590
        %v592 = vlaneseq
        %v593 = vshrl.u32 %v592, 7
        %v594 = vsub.s32 0, %v593
        %v595 = vrot.slane %v475, %v594
        %vm604 = vcmp.eq.f32.partialorder %v567, %v482
        %vm605 = vcmp.eq.f32.partialorder %v567, %v486
        %vm606 = vcmp.eq.f32.partialorder %v571, %v493
        %vm607 = vcmp.eq.f32.partialorder %v571, %v497
        %vm608 = vcmp.eq.f32.partialorder %v575, %v504
        %vm609 = vcmp.eq.f32.partialorder %v575, %v508
        %vm610 = vcmp.eq.f32.partialorder %v579, %v515
        %vm611 = vcmp.eq.f32.partialorder %v579, %v519
        %vm612 = vcmp.eq.f32.partialorder %v583, %v526
        %vm613 = vcmp.eq.f32.partialorder %v583, %v530
        %vm614 = vcmp.eq.f32.partialorder %v587, %v537
        %vm615 = vcmp.eq.f32.partialorder %v587, %v541
        %vm616 = vcmp.eq.f32.partialorder %v591, %v548
        %vm617 = vcmp.eq.f32.partialorder %v591, %v552
        %vm618 = vcmp.eq.f32.partialorder %v595, %v559
        %vm619 = vcmp.eq.f32.partialorder %v595, %v563
        %v620 = vsel %vm417, 1, 0
        %v621 = vcombine.high %v620, %v620
        %v623 = vunpack.c.l.s4 1966171168
        %v624 = vunpack.c.0.s8 %v623
        %v625 = vlaneseq
        %v626 = vshrl.u32 %v625, 7
        %v627 = vsub.s32 %v624, %v626
        %v628 = vrot.slane %v620, %v627
        %v630 = vunpack.c.l.s4 1966171168
        %v631 = vunpack.c.0.s8 %v630
        %v632 = vlaneseq
        %v633 = vshrl.u32 %v632, 7
        %v634 = vsub.s32 %v631, %v633
        %v635 = vrot.slane %v621, %v634
        %v636 = vcombine.high %v628, %v628
        %v637 = vcombine.high %v635, %v635
        %v639 = vunpack.c.l.s4 1966171168
        %v640 = vunpack.c.0.s8 %v639
        %v641 = vlaneseq
        %v642 = vshrl.u32 %v641, 7
        %v643 = vsub.s32 %v640, %v642
        %v644 = vrot.slane %v628, %v643
        %v646 = vunpack.c.l.s4 1966171168
        %v647 = vunpack.c.0.s8 %v646
        %v648 = vlaneseq
        %v649 = vshrl.u32 %v648, 7
        %v650 = vsub.s32 %v647, %v649
        %v651 = vrot.slane %v635, %v650
        %v653 = vunpack.c.l.s4 1966171168
        %v654 = vunpack.c.0.s8 %v653
        %v655 = vlaneseq
        %v656 = vshrl.u32 %v655, 7
        %v657 = vsub.s32 %v654, %v656
        %v658 = vrot.slane %v636, %v657
        %v660 = vunpack.c.l.s4 1966171168
        %v661 = vunpack.c.0.s8 %v660
        %v662 = vlaneseq
        %v663 = vshrl.u32 %v662, 7
        %v664 = vsub.s32 %v661, %v663
        %v665 = vrot.slane %v637, %v664
        %v666 = vcombine.high %v644, %v644
        %v667 = vcombine.high %v651, %v651
        %v668 = vcombine.high %v658, %v658
        %v669 = vcombine.high %v665, %v665
        %vm670 = vcmp.ne.s32.totalorder %v644, 0
        %vm671 = vcmp.ne.s32.totalorder %v658, 0
        %vm672 = vcmp.ne.s32.totalorder %v666, 0
        %vm673 = vcmp.ne.s32.totalorder %v668, 0
        %vm674 = vcmp.ne.s32.totalorder %v651, 0
        %vm675 = vcmp.ne.s32.totalorder %v665, 0
        %vm676 = vcmp.ne.s32.totalorder %v667, 0
        %vm677 = vcmp.ne.s32.totalorder %v669, 0
        %v678 = vsel %vm670, 1, 0
        %v679 = vsel %vm671, 1, 0
        %v680 = vsel %vm672, 1, 0
        %v681 = vsel %vm673, 1, 0
        %v682 = vsel %vm674, 1, 0
        %v683 = vsel %vm675, 1, 0
        %v684 = vsel %vm676, 1, 0
        %v685 = vsel %vm677, 1, 0
        %v686 = vlaneseq
        %v687 = vshrl.u32 %v686, 7
        %v688 = vsub.s32 0, %v687
        %v689 = vrot.slane %v678, %v688
        %v690 = vlaneseq
        %v691 = vshrl.u32 %v690, 7
        %v692 = vsub.s32 0, %v691
        %v693 = vrot.slane %v679, %v692
        %v694 = vlaneseq
        %v695 = vshrl.u32 %v694, 7
        %v696 = vsub.s32 0, %v695
        %v697 = vrot.slane %v680, %v696
        %v698 = vlaneseq
        %v699 = vshrl.u32 %v698, 7
        %v700 = vsub.s32 0, %v699
        %v701 = vrot.slane %v681, %v700
        %v702 = vlaneseq
        %v703 = vshrl.u32 %v702, 7
        %v704 = vsub.s32 0, %v703
        %v705 = vrot.slane %v682, %v704
        %v706 = vlaneseq
        %v707 = vshrl.u32 %v706, 7
        %v708 = vsub.s32 0, %v707
        %v709 = vrot.slane %v683, %v708
        %v710 = vlaneseq
        %v711 = vshrl.u32 %v710, 7
        %v712 = vsub.s32 0, %v711
        %v713 = vrot.slane %v684, %v712
        %v714 = vlaneseq
        %v715 = vshrl.u32 %v714, 7
        %v716 = vsub.s32 0, %v715
        %v717 = vrot.slane %v685, %v716
        %vm718 = vcmp.eq.s32.totalorder %v689, 1
        %vm719 = vcmp.eq.s32.totalorder %v693, 1
        %vm720 = vcmp.eq.s32.totalorder %v697, 1
        %vm721 = vcmp.eq.s32.totalorder %v701, 1
        %vm722 = vcmp.eq.s32.totalorder %v705, 1
        %vm723 = vcmp.eq.s32.totalorder %v709, 1
        %vm724 = vcmp.eq.s32.totalorder %v713, 1
        %vm725 = vcmp.eq.s32.totalorder %v717, 1
        %vm726 = vmand %vm604, %vm718
        %vm727 = vmand %vm605, %vm718
        %vm728 = vmand %vm606, %vm719
        %vm729 = vmand %vm607, %vm719
        %vm730 = vmand %vm608, %vm720
        %vm731 = vmand %vm609, %vm720
        %vm732 = vmand %vm610, %vm721
        %vm733 = vmand %vm611, %vm721
        %vm734 = vmand %vm612, %vm722
        %vm735 = vmand %vm613, %vm722
        %vm736 = vmand %vm614, %vm723
        %vm737 = vmand %vm615, %vm723
        %vm738 = vmand %vm616, %vm724
        %vm739 = vmand %vm617, %vm724
        %vm740 = vmand %vm618, %vm725
        %vm741 = vmand %vm619, %vm725
        %v742 = vsel %vm726, 1, 0
        %v743 = vsel %vm727, 1, 0
        %v744 = vsel %vm728, 1, 0
        %v745 = vsel %vm729, 1, 0
        %v746 = vsel %vm730, 1, 0
        %v747 = vsel %vm731, 1, 0
        %v748 = vsel %vm732, 1, 0
        %v749 = vsel %vm733, 1, 0
        %v750 = vsel %vm734, 1, 0
        %v751 = vsel %vm735, 1, 0
        %v752 = vsel %vm736, 1, 0
        %v753 = vsel %vm737, 1, 0
        %v754 = vsel %vm738, 1, 0
        %v755 = vsel %vm739, 1, 0
        %v756 = vsel %vm740, 1, 0
        %v757 = vsel %vm741, 1, 0
        %v758 = vcvt.s32.f32 %v742
        %v759 = vcvt.s32.f32 %v743
        %v760 = vcvt.s32.f32 %v744
        %v761 = vcvt.s32.f32 %v745
        %v762 = vcvt.s32.f32 %v746
        %v763 = vcvt.s32.f32 %v747
        %v764 = vcvt.s32.f32 %v748
        %v765 = vcvt.s32.f32 %v749
        %v766 = vcvt.s32.f32 %v750
        %v767 = vcvt.s32.f32 %v751
        %v768 = vcvt.s32.f32 %v752
        %v769 = vcvt.s32.f32 %v753
        %v770 = vcvt.s32.f32 %v754
        %v771 = vcvt.s32.f32 %v755
        %v772 = vcvt.s32.f32 %v756
        %v773 = vcvt.s32.f32 %v757
        %v774 = vpack.c.bf16 %v759, %v758
        %v775 = vpack.c.bf16 %v761, %v760
        %v776 = vpack.c.bf16 %v763, %v762
        %v777 = vpack.c.bf16 %v765, %v764
        %v778 = vpack.c.bf16 %v767, %v766
        %v779 = vpack.c.bf16 %v769, %v768
        %v780 = vpack.c.bf16 %v771, %v770
        %v781 = vpack.c.bf16 %v773, %v772
        %v782 = vld [vmem:[%s325] sm:$0xf]
        %v783 = vld [vmem:[%s329] sm:$0xf]
        %784 = vmatprep.subr.bf16.mxu0 0
        %785 = vmatpush1.bf16.xpose.msra.mxu0 %v774
        %786 = vmatprep.subr.bf16.mxu0 0
        %787 = vmatpush1.bf16.xpose.msra.mxu0 %v775
        %788 = vmatprep.subr.bf16.mxu0 0
        %789 = vmatpush1.bf16.xpose.msra.mxu0 %v776
        %790 = vmatprep.subr.bf16.mxu0 0
        %791 = vmatpush1.bf16.xpose.msra.mxu0 %v777
        %792 = vmatprep.subr.bf16.mxu0 0
        %793 = vmatpush1.bf16.xpose.msra.mxu0 %v778
        %794 = vmatprep.subr.bf16.mxu0 0
        %795 = vmatpush1.bf16.xpose.msra.mxu0 %v779
        %796 = vmatprep.subr.bf16.mxu0 0
        %797 = vmatpush1.bf16.xpose.msra.mxu0 %v780
        %798 = vmatprep.subr.bf16.mxu0 0
        %799 = vmatpush1.bf16.xpose.msra.mxu0 %v781
        %800 = vmatprep.subr.bf16.mxu0 0
        %801 = vmatpush1.bf16.xpose.msra.mxu0 0
        %802 = vmatprep.subr.bf16.mxu0 0
        %803 = vmatpush1.bf16.xpose.msra.mxu0 0
        %804 = vmatprep.subr.bf16.mxu0 0
        %805 = vmatpush1.bf16.xpose.msra.mxu0 0
        %806 = vmatprep.subr.bf16.mxu0 0
        %807 = vmatpush1.bf16.xpose.msra.mxu0 0
        %808 = vmatprep.subr.bf16.mxu0 0
        %809 = vmatpush1.bf16.xpose.msra.mxu0 0
        %810 = vmatprep.subr.bf16.mxu0 0
        %811 = vmatpush1.bf16.xpose.msra.mxu0 0
        %812 = vmatprep.subr.bf16.mxu0 0
        %813 = vmatpush1.bf16.xpose.msra.mxu0 0
        %814 = vmatprep.subr.bf16.mxu0 0
        %815 = vmatpush1.bf16.xpose.msra.mxu0 0
        %816 = vmatprep.mubr.bf16.mxu0 0
        %817 = vmatmul.mubr.bf16.gmra.mrb[0].mxu0 %v783
        %v818 = vpop.f32.mrb[0].mxu0
        %v819 = vadd.f32 0.0, %v818
        %v820 = vpop.f32.mrb[0].mxu0
        %v821 = vpop.f32.mrb[0].mxu0
        %v822 = vpop.f32.mrb[0].mxu0
        %823 = vdwg.mxu0
        %824 = vmatprep.subr.bf16.mxu0 0
        %825 = vmatpush1.bf16.xpose.msra.mxu0 %v774
        %826 = vmatprep.subr.bf16.mxu0 0
        %827 = vmatpush1.bf16.xpose.msra.mxu0 %v775
        %828 = vmatprep.subr.bf16.mxu0 0
        %829 = vmatpush1.bf16.xpose.msra.mxu0 %v776
        %830 = vmatprep.subr.bf16.mxu0 0
        %831 = vmatpush1.bf16.xpose.msra.mxu0 %v777
        %832 = vmatprep.subr.bf16.mxu0 0
        %833 = vmatpush1.bf16.xpose.msra.mxu0 %v778
        %834 = vmatprep.subr.bf16.mxu0 0
        %835 = vmatpush1.bf16.xpose.msra.mxu0 %v779
        %836 = vmatprep.subr.bf16.mxu0 0
        %837 = vmatpush1.bf16.xpose.msra.mxu0 %v780
        %838 = vmatprep.subr.bf16.mxu0 0
        %839 = vmatpush1.bf16.xpose.msra.mxu0 %v781
        %840 = vmatprep.subr.bf16.mxu0 0
        %841 = vmatpush1.bf16.xpose.msra.mxu0 0
        %842 = vmatprep.subr.bf16.mxu0 0
        %843 = vmatpush1.bf16.xpose.msra.mxu0 0
        %844 = vmatprep.subr.bf16.mxu0 0
        %845 = vmatpush1.bf16.xpose.msra.mxu0 0
        %846 = vmatprep.subr.bf16.mxu0 0
        %847 = vmatpush1.bf16.xpose.msra.mxu0 0
        %848 = vmatprep.subr.bf16.mxu0 0
        %849 = vmatpush1.bf16.xpose.msra.mxu0 0
        %850 = vmatprep.subr.bf16.mxu0 0
        %851 = vmatpush1.bf16.xpose.msra.mxu0 0
        %852 = vmatprep.subr.bf16.mxu0 0
        %853 = vmatpush1.bf16.xpose.msra.mxu0 0
        %854 = vmatprep.subr.bf16.mxu0 0
        %855 = vmatpush1.bf16.xpose.msra.mxu0 0
        %856 = vmatprep.mubr.bf16.mxu0 0
        %857 = vmatmul.mubr.bf16.gmra.mrb[0].mxu0 %v782
        %v858 = vpop.f32.mrb[0].mxu0
        %v859 = vadd.f32 %v819, %v858
        %v860 = vpop.f32.mrb[0].mxu0
        %v861 = vpop.f32.mrb[0].mxu0
        %v862 = vpop.f32.mrb[0].mxu0
        %863 = vdwg.mxu0
        %v864 = vld [vmem:[%s321] sm:$0xff]
        %865 = vxpose.xlu0.b32.start [1/16] %v864, 128
        %866 = vxpose.xlu0.b32.cont [2/16] 0.0, 128
        %867 = vxpose.xlu0.b32.cont [3/16] 0.0, 128
        %868 = vxpose.xlu0.b32.cont [4/16] 0.0, 128
        %869 = vxpose.xlu0.b32.cont [5/16] 0.0, 128
        %870 = vxpose.xlu0.b32.cont [6/16] 0.0, 128
        %871 = vxpose.xlu0.b32.cont [7/16] 0.0, 128
        %872 = vxpose.xlu0.b32.cont [8/16] 0.0, 128
        %873 = vxpose.xlu0.b32.cont [9/16] 0.0, 128
        %874 = vxpose.xlu0.b32.cont [10/16] 0.0, 128
        %875 = vxpose.xlu0.b32.cont [11/16] 0.0, 128
        %876 = vxpose.xlu0.b32.cont [12/16] 0.0, 128
        %877 = vxpose.xlu0.b32.cont [13/16] 0.0, 128
        %878 = vxpose.xlu0.b32.cont [14/16] 0.0, 128
        %879 = vxpose.xlu0.b32.cont [15/16] 0.0, 128
        %880 = vxpose.xlu0.b32.end [16/16] 0.0, 128
        %v881 = vpop.trf.xlu0
        %v882 = vpop.trf.xlu0
        %v883 = vpop.trf.xlu0
        %v884 = vpop.trf.xlu0
        %v885 = vpop.trf.xlu0
        %v886 = vpop.trf.xlu0
        %v887 = vpop.trf.xlu0
        %v888 = vpop.trf.xlu0
        %v889 = vpop.trf.xlu0
        %v890 = vpop.trf.xlu0
        %v891 = vpop.trf.xlu0
        %v892 = vpop.trf.xlu0
        %v893 = vpop.trf.xlu0
        %v894 = vpop.trf.xlu0
        %v895 = vpop.trf.xlu0
        %v896 = vpop.trf.xlu0
        %v897 = vpack.c.bf16 %v881, %v881
        %v898 = vunpack.c.l.bf16 %v897
        %v899 = vsub.f32 %v881, %v898
        %v900 = vpack.c.bf16 %v899, %v899
        %v901 = vlaneseq
        %v902 = vshrl.u32 %v901, 7
        %v903 = vmul.u32 %v902, 16
        %vm904 = vcmp.ge.s32.totalorder %v369, %v903
        %v905 = vadd.s32 %v902, 1
        %v906 = vmul.u32 %v905, 16
        %vm907 = vcmp.lt.s32.totalorder %v369, %v906
        %vm908 = vmand %vm904, %vm907
        %v909 = vsel %vm908, 1, 0
        %v910 = vcvt.s32.f32 %v909
        %v911 = vpack.c.bf16 %v910, %v910
        %vm912 = vcmask 64512
        %v914 = vsel %vm912, %v900, 0
        %vm916 = vcmask 1043456
        %v918 = vsel %vm916, %v911, 0
        %920 = vmatprep.subr.bf16.mxu0 0
        %921 = vmatpush1.bf16.msra.mxu0 %v918
        %922 = vmatprep.subr.bf16.mxu0 0
        %923 = vmatpush1.bf16.msra.mxu0 0
        %924 = vmatprep.subr.bf16.mxu0 0
        %925 = vmatpush1.bf16.msra.mxu0 0
        %926 = vmatprep.subr.bf16.mxu0 0
        %927 = vmatpush1.bf16.msra.mxu0 0
        %928 = vmatprep.subr.bf16.mxu0 0
        %929 = vmatpush1.bf16.msra.mxu0 0
        %930 = vmatprep.subr.bf16.mxu0 0
        %931 = vmatpush1.bf16.msra.mxu0 0
        %932 = vmatprep.subr.bf16.mxu0 0
        %933 = vmatpush1.bf16.msra.mxu0 0
        %934 = vmatprep.subr.bf16.mxu0 0
        %935 = vmatpush1.bf16.msra.mxu0 0
        %936 = vmatprep.subr.bf16.mxu0 0
        %937 = vmatpush1.bf16.msra.mxu0 0
        %938 = vmatprep.subr.bf16.mxu0 0
        %939 = vmatpush1.bf16.msra.mxu0 0
        %940 = vmatprep.subr.bf16.mxu0 0
        %941 = vmatpush1.bf16.msra.mxu0 0
        %942 = vmatprep.subr.bf16.mxu0 0
        %943 = vmatpush1.bf16.msra.mxu0 0
        %944 = vmatprep.subr.bf16.mxu0 0
        %945 = vmatpush1.bf16.msra.mxu0 0
        %946 = vmatprep.subr.bf16.mxu0 0
        %947 = vmatpush1.bf16.msra.mxu0 0
        %948 = vmatprep.subr.bf16.mxu0 0
        %949 = vmatpush1.bf16.msra.mxu0 0
        %950 = vmatprep.subr.bf16.mxu0 0
        %951 = vmatpush1.bf16.msra.mxu0 0
        %952 = vmatprep.mubr.bf16.mxu0 0
        %953 = vmatmul.mubr.bf16.gmra.mrb[0].mxu0 %v914
        %v954 = vpop.f32.mrb[0].mxu0
        %v955 = vadd.f32 0.0, %v954
        %v956 = vpop.f32.mrb[0].mxu0
        %v957 = vpop.f32.mrb[0].mxu0
        %v958 = vpop.f32.mrb[0].mxu0
        %959 = vdwg.mxu0
        %v961 = vsel %vm912, %v897, 0
        %963 = vmatprep.subr.bf16.mxu0 0
        %964 = vmatpush1.bf16.msra.mxu0 %v918
        %965 = vmatprep.subr.bf16.mxu0 0
        %966 = vmatpush1.bf16.msra.mxu0 0
        %967 = vmatprep.subr.bf16.mxu0 0
        %968 = vmatpush1.bf16.msra.mxu0 0
        %969 = vmatprep.subr.bf16.mxu0 0
        %970 = vmatpush1.bf16.msra.mxu0 0
        %971 = vmatprep.subr.bf16.mxu0 0
        %972 = vmatpush1.bf16.msra.mxu0 0
        %973 = vmatprep.subr.bf16.mxu0 0
        %974 = vmatpush1.bf16.msra.mxu0 0
        %975 = vmatprep.subr.bf16.mxu0 0
        %976 = vmatpush1.bf16.msra.mxu0 0
        %977 = vmatprep.subr.bf16.mxu0 0
        %978 = vmatpush1.bf16.msra.mxu0 0
        %979 = vmatprep.subr.bf16.mxu0 0
        %980 = vmatpush1.bf16.msra.mxu0 0
        %981 = vmatprep.subr.bf16.mxu0 0
        %982 = vmatpush1.bf16.msra.mxu0 0
        %983 = vmatprep.subr.bf16.mxu0 0
        %984 = vmatpush1.bf16.msra.mxu0 0
        %985 = vmatprep.subr.bf16.mxu0 0
        %986 = vmatpush1.bf16.msra.mxu0 0
        %987 = vmatprep.subr.bf16.mxu0 0
        %988 = vmatpush1.bf16.msra.mxu0 0
        %989 = vmatprep.subr.bf16.mxu0 0
        %990 = vmatpush1.bf16.msra.mxu0 0
        %991 = vmatprep.subr.bf16.mxu0 0
        %992 = vmatpush1.bf16.msra.mxu0 0
        %993 = vmatprep.subr.bf16.mxu0 0
        %994 = vmatpush1.bf16.msra.mxu0 0
        %995 = vmatprep.mubr.bf16.mxu0 0
        %996 = vmatmul.mubr.bf16.gmra.mrb[0].mxu0 %v961
        %v997 = vpop.f32.mrb[0].mxu0
        %v998 = vadd.f32 %v955, %v997
        %v999 = vpop.f32.mrb[0].mxu0
        %v1000 = vpop.f32.mrb[0].mxu0
        %v1001 = vpop.f32.mrb[0].mxu0
        %1002 = vdwg.mxu0
        %v1003 = vsub.f32 %v859, %v998
        %1004 = vst [vmem:[%s301] sm:$0xff] %v1003
        %s1005 = sand.u32 %s175, 1
        %s1006 = scalar_lea.sflag [#allocation3], %s1005
        %s1007 = sand.u32 %s175, 1
        %s1008 = smul.addr %s1007, 8
        %s1009 = scalar_lea.vmem [#allocation2], %s1008
        // Predicated region
        $region41: #{tpu_custom_call.1} parent=39 // pred_check
          %p1010 = pneg %p185
        $region42: #{tpu_custom_call.1} parent=39 // pred_check_branch
          %1012 = sbr.rel (%p1010) target = $region44
        $region43: #{tpu_custom_call.1} parent=39 // pred_region
          %s1014 = ssub.s32 128, 128
          %1015 = vsyncadd %s1006, %s1014
          %s1016 = smul.addr %s23, 2
          %s1017 = sadd.s32 %s24, %s1016
          %s1018 = smul.addr %s1017, 128
          %s1019 = scalar_lea.hbm %s5, %s1018
          %s1021 = sshll.u32 %s1009, 4
          %s1022 = int_to_ptr.vmem [resolvable:$true] %s1021
          %1024 = dma.vmem_to_hbm [thread:$0]  %s1022, 128, %s1019, %s1006
        $region44: #{tpu_custom_call.1} parent=39 // pred_fallthru
          _
      $region40: #{tpu_custom_call.1} parent=5 // pred_fallthru
        _
      %p1025 = scmp.le.s32.totalorder 2, %s14
      // Predicated region
      $region45: #{tpu_custom_call.1} parent=5 // pred_check
        %p1026 = pneg %p1025
      $region46: #{tpu_custom_call.1} parent=5 // pred_check_branch
        %1028 = sbr.rel (%p1026) target = $region48
      $region47: #{tpu_custom_call.1} parent=5 // pred_region
        %s1029 = ssub.s32 %s14, 2
        // Predicated region
        $region49: #{tpu_custom_call.1} parent=47 // pred_check
          %p1030 = pneg %p191
        $region50: #{tpu_custom_call.1} parent=47 // pred_check_branch
          %1032 = sbr.rel (%p1030) target = $region52
        $region51: #{tpu_custom_call.1} parent=47 // pred_region
          %s1033 = sand.u32 %s176, 1
          %s1034 = scalar_lea.sflag [#allocation3], %s1033
          %s1035 = sand.u32 %s176, 1
          %s1036 = smul.addr %s1035, 8
          %s1037 = scalar_lea.vmem [#allocation2], %s1036
          %1038 = dma.done %s1034, 128
        $region52: #{tpu_custom_call.1} parent=47 // pred_fallthru
          _
      $region48: #{tpu_custom_call.1} parent=5 // pred_fallthru
        _
    $region6: #{tpu_custom_call.1} parent=1 // loop_footer
      %s18 = sadd.s32 1, %s14
    $region7: #{tpu_custom_call.1} parent=1 // loop_footer_branch
      %13 = sbr.rel target = $region3
    $region8: #{tpu_custom_call.1} parent=1 // loop_exit
      _
    %1039 = vsyncpa [#allocation3], 1
    %s1040 = scalar_lea.sflag [#allocation3], 1
    %1041 = vsyncpa %s1040, 1

</llo_original>
